<compile_context>
chip_gen: v7x
topology: tpu7x:2x2x1
jax: 0.10.0
libtpu: 0.0.40
codegen_flags: <defaults>
</compile_context>

<pallas_src>
import functools

import jax
import jax.numpy as jnp
from jax.experimental import pallas as pl
from jax.experimental.pallas import tpu as pltpu

# TODO(synk): the PyTorch module's __init__ never defines self.loss_weight
# (used in forward); expose it here as a static wrapper argument defaulting to
# the standard DFL value of 1.0.
DEFAULT_LOSS_WEIGHT = 1.0


def _round_up(x, m):
    return ((x + m - 1) // m) * m


def _cdiv(a, b):
    return -(-a // b)


def _choose_block_n(n, block_n_max):
    """Pick (block_n, num_steps) for the lane (box) axis.

    - block_n is a multiple of 128 (lane-dense blocks, unmasked stores)
    - padding waste is < num_steps * 128 lanes (no whole-block padding)
    - num_steps is even (>= 2 when N allows) so the single "parallel" grid
      axis load-balances across v7x's two TensorCores
    - block_n is large enough to amortize the ~0.35us per-grid-step overhead
    """
    n128 = _round_up(n, 128)
    bn_rough = min(block_n_max, max(2048, n128 // 8))
    steps = max(1, _cdiv(n128, bn_rough))
    if steps == 1 and n128 >= 1024:
        steps = 2                      # give both v7x TCs work when possible
    if steps > 1:
        steps += steps % 2             # even step count for 2-TC balance
    bn = _round_up(_cdiv(n128, steps), 128)
    return bn, steps


def _dfl_kernel(pred_ref, tgt_ref, out_ref, *, loss_weight):
    # pred_ref: (C, BN) -- classes on sublanes, boxes on lanes (lane-dense)
    # tgt_ref:  (1, BN) f32
    # out_ref:  (1, BN) f32
    pred = pred_ref[...].astype(jnp.float32)
    tgt = tgt_ref[...]
    c = pred.shape[0]

    # Shifted, numerically-stable logsumexp over the class axis (sublanes).
    # Work on t = pred - m so the raw f32 pred dies after this subtract.
    m = jnp.max(pred, axis=0, keepdims=True)
    t = pred - m
    lse_shifted = jnp.log(jnp.sum(jnp.exp(t), axis=0, keepdims=True))

    # Fused gather via triangular weights w[c] = max(1 - |c - target|, 0):
    # w equals w_left at dis_left, w_right at dis_right and 0 elsewhere (for
    # 0 <= target < C-1), and sum_c w[c] == 1, so
    #   loss = logsumexp(pred) - sum_c w[c]*pred[c]
    #        = lse_shifted     - sum_c w[c]*t[c]
    # The iota is built as a tiny (C, 1) tile (cast once) and expanded only by
    # the broadcasting subtract -- no (C, BN) iota / convert on the VPU.
    cls = jax.lax.broadcasted_iota(jnp.int32, (c, 1), 0).astype(jnp.float32)
    w = jnp.maximum(1.0 - jnp.abs(cls - tgt), 0.0)
    picked = jnp.sum(w * t, axis=0, keepdims=True)

    out_ref[...] = (loss_weight * (lse_shifted - picked)).astype(out_ref.dtype)


@functools.partial(jax.jit, static_argnames=("loss_weight", "block_n_max"))
def distribution_focal_loss_pallas(pred, target, *,
                                   loss_weight=DEFAULT_LOSS_WEIGHT,
                                   block_n_max=32768):
    """pred: (N, C) float (f32 or bf16), target: (N,) float -> loss (N,) f32."""
    n, c = pred.shape
    bn, steps = _choose_block_n(n, block_n_max)
    n_pad = bn * steps

    # Layout plumbing: boxes (N) on the lane axis, classes on sublanes. Keep
    # pred's input dtype at the HBM boundary (bf16-friendly); pad with zeros
    # (finite math on the dead lanes, sliced off below). allow_input_fusion
    # below lets XLA fuse this transpose+pad into the pallas_call input
    # instead of materializing a second HBM copy of pred.
    pred_t = jnp.pad(jnp.transpose(pred), ((0, 0), (0, n_pad - n)))
    tgt2d = jnp.pad(target.astype(jnp.float32).reshape(1, n),
                    ((0, 0), (0, n_pad - n)))

    kernel = functools.partial(_dfl_kernel, loss_weight=float(loss_weight))

    cost = pl.CostEstimate(
        flops=int(10 * c * n_pad),
        transcendentals=int((c + 1) * n_pad),
        bytes_accessed=int(c * n_pad * pred.dtype.itemsize + 8 * n_pad),
    )

    out = pl.pallas_call(
        kernel,
        out_shape=jax.ShapeDtypeStruct((1, n_pad), jnp.float32),
        grid_spec=pltpu.PrefetchScalarGridSpec(
            num_scalar_prefetch=0,
            grid=(steps,),
            in_specs=[
                pl.BlockSpec((c, bn), lambda i: (0, i)),
                pl.BlockSpec((1, bn), lambda i: (0, i)),
            ],
            out_specs=pl.BlockSpec((1, bn), lambda i: (0, i)),
        ),
        compiler_params=pltpu.CompilerParams(
            dimension_semantics=("parallel",),
            vmem_limit_bytes=32 * 1024 * 1024,   # v5e default scoped VMEM is 16 MiB
            allow_input_fusion=[True, True],
        ),
        cost_estimate=cost,
    )(pred_t, tgt2d)
    return out[0, :n]


def _reference(pred, target, loss_weight=DEFAULT_LOSS_WEIGHT):
    pred = pred.astype(jnp.float32)
    target = target.astype(jnp.float32)
    dis_left = target.astype(jnp.int32)
    dis_right = dis_left + 1
    w_left = dis_right.astype(jnp.float32) - target
    w_right = target - dis_left.astype(jnp.float32)
    lse = jax.scipy.special.logsumexp(pred, axis=-1)
    ce_l = lse - jnp.take_along_axis(pred, dis_left[:, None], axis=-1)[:, 0]
    ce_r = lse - jnp.take_along_axis(pred, dis_right[:, None], axis=-1)[:, 0]
    return loss_weight * (ce_l * w_left + ce_r * w_right)


if __name__ == "__main__":
    key = jax.random.PRNGKey(0)
    REG_MAX = 16     # n in the paper -> C = n + 1 bins
    C = REG_MAX + 1

    # Case 1: small N, not a multiple of 128 -> exercises the padded tail and
    # the single-block path.
    # Case 2: moderate N -> exercises the multi-step (>=2, even) grid path.
    for N in (200, 3000):
        k1, k2, key = jax.random.split(key, 3)
        pred = jax.random.normal(k1, (N, C), dtype=jnp.float32)
        # Continuous distances in [0, n); strictly below n so dis_right <= n.
        target = jax.random.uniform(k2, (N,), dtype=jnp.float32,
                                    minval=0.0, maxval=REG_MAX - 1e-3)
        # Integer-valued targets: fractional part exactly 0 -> weight on the
        # right bin must be exactly 0.
        target = target.at[:4].set(jnp.array([0.0, 1.0, 7.0, 15.0], jnp.float32))

        loss = distribution_focal_loss_pallas(pred, target)
        jax.block_until_ready(loss)

        ref = _reference(pred, target)
        assert loss.shape == (N,)
        max_err = jnp.max(jnp.abs(loss - ref))
        assert jnp.allclose(loss, ref, atol=1e-4, rtol=1e-4), (
            f"N={N} max err {max_err}")

    print("KERNEL_OK")
</pallas_src>

<mosaic_0001>
module attributes {stable_mosaic.version = 11 : i64} {
  func.func @_dfl_kernel(%arg0: i32, %arg1: memref<17x256xf32, #tpu.memory_space<vmem>>, %arg2: memref<1x256xf32, #tpu.memory_space<vmem>>, %arg3: memref<1x256xf32, #tpu.memory_space<vmem>>) attributes {dimension_semantics = [#tpu.dimension_semantics<parallel>], iteration_bounds = array<i64: 1>, scalar_prefetch = 0 : i64, scratch_operands = 0 : i64, tpu.core_type = #tpu.core_type<tc>, window_params = [{transform_indices = @transform_0, window_bounds = array<i64: 17, 256>}, {transform_indices = @transform_1, window_bounds = array<i64: 1, 256>}, {transform_indices = @transform_2, window_bounds = array<i64: 1, 256>}]} {
    %c0 = arith.constant 0 : index
    %c0_0 = arith.constant 0 : index
    %0 = vector.load %arg1[%c0, %c0_0] : memref<17x256xf32, #tpu.memory_space<vmem>>, vector<17x256xf32>
    %c0_1 = arith.constant 0 : index
    %c0_2 = arith.constant 0 : index
    %1 = vector.load %arg2[%c0_1, %c0_2] : memref<1x256xf32, #tpu.memory_space<vmem>>, vector<1x256xf32>
    %cst = arith.constant dense<0xFF800000> : vector<256xf32>
    %2 = vector.multi_reduction <maximumf>, %0, %cst [0] : vector<17x256xf32> to vector<256xf32>
    %3 = vector.shape_cast %2 : vector<256xf32> to vector<1x256xf32>
    %4 = vector.broadcast %3 : vector<1x256xf32> to vector<17x256xf32>
    %5 = arith.subf %0, %4 : vector<17x256xf32>
    %6 = math.exp %5 : vector<17x256xf32>
    %cst_3 = arith.constant dense<0.000000e+00> : vector<256xf32>
    %7 = vector.multi_reduction <add>, %6, %cst_3 [0] : vector<17x256xf32> to vector<256xf32>
    %8 = vector.shape_cast %7 : vector<256xf32> to vector<1x256xf32>
    %9 = math.log %8 : vector<1x256xf32>
    %10 = tpu.iota {dimensions = array<i32: 0>} : vector<17x1xi32>
    %11 = arith.sitofp %10 : vector<17x1xi32> to vector<17x1xf32>
    %12 = vector.broadcast %11 : vector<17x1xf32> to vector<17x256xf32>
    %13 = vector.broadcast %1 : vector<1x256xf32> to vector<17x256xf32>
    %14 = arith.subf %12, %13 : vector<17x256xf32>
    %15 = math.absf %14 : vector<17x256xf32>
    %cst_4 = arith.constant 1.000000e+00 : f32
    %16 = vector.broadcast %cst_4 : f32 to vector<17x256xf32>
    %17 = arith.subf %16, %15 : vector<17x256xf32>
    %cst_5 = arith.constant 0.000000e+00 : f32
    %18 = vector.broadcast %cst_5 : f32 to vector<17x256xf32>
    %19 = arith.maximumf %17, %18 : vector<17x256xf32>
    %20 = arith.mulf %19, %5 : vector<17x256xf32>
    %cst_6 = arith.constant dense<0.000000e+00> : vector<256xf32>
    %21 = vector.multi_reduction <add>, %20, %cst_6 [0] : vector<17x256xf32> to vector<256xf32>
    %22 = vector.shape_cast %21 : vector<256xf32> to vector<1x256xf32>
    %23 = arith.subf %9, %22 : vector<1x256xf32>
    %cst_7 = arith.constant 1.000000e+00 : f32
    %24 = vector.broadcast %cst_7 : f32 to vector<1x256xf32>
    %25 = arith.mulf %24, %23 : vector<1x256xf32>
    %c0_8 = arith.constant 0 : index
    %c0_9 = arith.constant 0 : index
    %26 = vector.load %arg3[%c0_8, %c0_9] : memref<1x256xf32, #tpu.memory_space<vmem>>, vector<1x256xf32>
    tpu.vector_store %arg3[%c0_8, %c0_9], %25 {strides = array<i32>} : memref<1x256xf32, #tpu.memory_space<vmem>>, vector<1x256xf32>,
    return
  }
  func.func @transform_0(%arg0: i32) -> (i32, i32) {
    %c0_i32 = arith.constant 0 : i32
    %c0_i32_0 = arith.constant 0 : i32
    return %c0_i32, %arg0 : i32, i32
  }
  func.func @transform_1(%arg0: i32) -> (i32, i32) {
    %c0_i32 = arith.constant 0 : i32
    %c0_i32_0 = arith.constant 0 : i32
    return %c0_i32, %arg0 : i32, i32
  }
  func.func @transform_2(%arg0: i32) -> (i32, i32) {
    %c0_i32 = arith.constant 0 : i32
    %c0_i32_0 = arith.constant 0 : i32
    return %c0_i32, %arg0 : i32, i32
  }
}

</mosaic_0001>

<llo_original>
// kernel: distribution_focal_loss_pallas.2
$region0: #{distribution_focal_loss_pallas.2}
  #allocation0 [shape = 'u32[]', space=smem, size = 0x4, offset = 0x4, fixed_abs, tag = 'smem constant byte address 0x4 - core index']
  #allocation1 [shape = 'u32[144,128]{1,0:T(1,128)}', space=vmem, size = 0x12000, scoped, tag = 'internal scratch']
  #allocation2 [shape = 'u32[2048]{0}', space=vmem, size = 0x2000, scoped, tag = 'scoped memory for distribution_focal_loss_pallas.2']
  #allocation3 [shape = 'u32[2048]{0}', space=vmem, size = 0x2000, scoped, tag = 'scoped memory for distribution_focal_loss_pallas.2']
  #allocation4 [shape = 'u32[2048]{0}', space=vmem, size = 0x2000, scoped, tag = 'scoped memory for distribution_focal_loss_pallas.2']
  #allocation5 [shape = 'u32[2048]{0}', space=vmem, size = 0x2000, scoped, tag = 'scoped memory for distribution_focal_loss_pallas.2']
  #allocation6 [shape = 'u32[2048]{0}', space=vmem, size = 0x2000, scoped, tag = 'scoped memory for distribution_focal_loss_pallas.2']
  #allocation7 [shape = 'u32[2048]{0}', space=vmem, size = 0x2000, scoped, tag = 'scoped memory for distribution_focal_loss_pallas.2']
  #allocation8 [shape = 'u32[2048]{0}', space=vmem, size = 0x2000, scoped, tag = 'scoped memory for distribution_focal_loss_pallas.2']
  #allocation9 [shape = 'u32[2048]{0}', space=vmem, size = 0x2000, scoped, tag = 'scoped memory for distribution_focal_loss_pallas.2']
  #allocation10 [shape = 'u32[2048]{0}', space=vmem, size = 0x2000, scoped, tag = 'scoped memory for distribution_focal_loss_pallas.2']
  #allocation11 [shape = 'u32[2048]{0}', space=vmem, size = 0x2000, scoped, tag = 'scoped memory for distribution_focal_loss_pallas.2']
  %s0 = inlined_call_operand.hbm [shape: f32[17,200], index: 0, kind: input, shape index: {}]
  %s1 = inlined_call_operand.<no memory space> [shape: f32[], index: 1, kind: input, shape index: {}]
  %s2 = inlined_call_operand.vmem [shape: f32[1,200], index: 2, kind: input, shape index: {}]
  %s3 = inlined_call_operand.hbm [shape: f32[1,256], index: 3, kind: output, shape index: {}]
  %s4 = sld [smem:[#allocation0]]
  $region22: #{distribution_focal_loss_pallas.2} parent=0
    _
  %s6 = ssub.s32 1, %s4
  %s7 = scalar_select 0, %s6, %s4
  %v8 = vstv %s1
  %v9 = vstv %s1
  $region1: #{distribution_focal_loss_pallas.2} parent=0
    #allocation12 [shape = 'u8[24576]{0}', space=vmem, size = 0x6000, scoped, tag = 'operand span for operand 0']
    #allocation13 [shape = 's32[1]{0}', space=sflag, size = 0x4, scoped, tag = 'scoped memory for distribution_focal_loss_pallas.2']
    #allocation14 [shape = 's32[1]{0}', space=sflag, size = 0x4, scoped, tag = 'scoped memory for distribution_focal_loss_pallas.2']
    #allocation15 [shape = 'u8[1024]{0}', space=vmem, size = 0x400, scoped, tag = 'output window, operand 0, single buffered']
    #allocation16 [shape = 'u8[24576]{0}', space=vmem, size = 0x6000, dematerialized = true, scoped, tag = 'FusionAdapter Buffer %fusion.1 = f32[17,256]{1,0:T(8,128)} fusion(%param_0.3, %param_1.3), kind=kLoop, calls=%fused_computation.1.clone, metadata={op_name="jit(distribution_focal_loss_pallas)/jit(_pad)/pad" stack_frame_id=8}']
    #allocation17 [shape = 'u8[1024]{0}', space=vmem, size = 0x400, dematerialized = true, scoped, tag = 'FusionAdapter Buffer %fusion.2 = f32[1,256]{1,0:T(1,128)} fusion(%param_2.1, %param_1.3), kind=kLoop, calls=%fused_computation.2.clone, metadata={op_name="jit(distribution_focal_loss_pallas)/jit(_pad)/pad" stack_frame_id=10}']
    %10 = vsyncpa [#allocation13], 0
    %11 = vsyncpa [#allocation14], 0
    // Predicated region
    $region2: #{distribution_focal_loss_pallas.2} parent=1 // pred_check
      _
    $region3: #{distribution_focal_loss_pallas.2} parent=1 // pred_check_branch
      %13 = sbr.rel (0) target = $region5
    $region4: #{distribution_focal_loss_pallas.2} parent=1 // pred_region
      %s15 = ssub.s32 768, 768
      %16 = vsyncadd [#allocation13], %s15
      %s17 = sshll.u32 [#allocation12], 4
      %s18 = int_to_ptr.vmem [resolvable:$true] %s17
      %23 = dma.hbm_to_vmem [thread:$0]  %s0, 768, %s18, [#allocation13], 256, 256, 16
    $region5: #{distribution_focal_loss_pallas.2} parent=1 // pred_fallthru
      _
    // Predicated region
    $region6: #{distribution_focal_loss_pallas.2} parent=1 // pred_check
      _
    $region7: #{distribution_focal_loss_pallas.2} parent=1 // pred_check_branch
      %25 = sbr.rel (0) target = $region9
    $region8: #{distribution_focal_loss_pallas.2} parent=1 // pred_region
      _
    $region9: #{distribution_focal_loss_pallas.2} parent=1 // pred_fallthru
      _
    // Predicated region
    $region10: #{distribution_focal_loss_pallas.2} parent=1 // pred_check
      _
    $region11: #{distribution_focal_loss_pallas.2} parent=1 // pred_check_branch
      %27 = sbr.rel (0) target = $region13
    $region12: #{distribution_focal_loss_pallas.2} parent=1 // pred_region
      %28 = dma.done [#allocation13], 768
    $region13: #{distribution_focal_loss_pallas.2} parent=1 // pred_fallthru
      _
    %v29 = vld [vmem:[#allocation12] sm:$0xff]
    %v30 = vlaneseq
    %v31 = vshrl.u32 %v30, 7
    %vm33 = vcmp.lt.s32.totalorder %v31, 17
    %v34 = vsel %vm33, %v29, %v8
    %v35 = vlaneseq
    %v36 = vand.u32 %v35, 127
    %vm38 = vcmp.lt.s32.totalorder %v36, 200
    %v39 = vsel %vm38, %v34, %v8
    %41 = vst [vmem:[#allocation16] sm:$0xff] %v39
    %s42 = scalar_lea.vmem [#allocation12], 8
    %v43 = vld [vmem:[%s42] sm:$0xff]
    %v44 = vlaneseq
    %v45 = vshrl.u32 %v44, 7
    %vm47 = vcmp.lt.s32.totalorder %v45, 17
    %v48 = vsel %vm47, %v43, %v8
    %v49 = vlaneseq
    %v50 = vand.u32 %v49, 127
    %v51 = vadd.s32 %v50, 128
    %vm52 = vcmp.lt.s32.totalorder %v51, 200
    %v53 = vsel %vm52, %v48, %v8
    %s54 = scalar_lea.vmem [#allocation16], 8
    %56 = vst [vmem:[%s54] sm:$0xff] %v53
    %s57 = scalar_lea.vmem [#allocation12], 16
    %v58 = vld [vmem:[%s57] sm:$0xff]
    %v59 = vlaneseq
    %v60 = vshrl.u32 %v59, 7
    %v61 = vadd.s32 %v60, 8
    %vm62 = vcmp.lt.s32.totalorder %v61, 17
    %v63 = vsel %vm62, %v58, %v8
    %v64 = vlaneseq
    %v65 = vand.u32 %v64, 127
    %vm67 = vcmp.lt.s32.totalorder %v65, 200
    %v68 = vsel %vm67, %v63, %v8
    %s69 = scalar_lea.vmem [#allocation16], 16
    %71 = vst [vmem:[%s69] sm:$0xff] %v68
    %s72 = scalar_lea.vmem [#allocation12], 24
    %v73 = vld [vmem:[%s72] sm:$0xff]
    %v74 = vlaneseq
    %v75 = vshrl.u32 %v74, 7
    %v76 = vadd.s32 %v75, 8
    %vm77 = vcmp.lt.s32.totalorder %v76, 17
    %v78 = vsel %vm77, %v73, %v8
    %v79 = vlaneseq
    %v80 = vand.u32 %v79, 127
    %v81 = vadd.s32 %v80, 128
    %vm82 = vcmp.lt.s32.totalorder %v81, 200
    %v83 = vsel %vm82, %v78, %v8
    %s84 = scalar_lea.vmem [#allocation16], 24
    %86 = vst [vmem:[%s84] sm:$0xff] %v83
    %s87 = scalar_lea.vmem [#allocation12], 32
    %v88 = vld [vmem:[%s87] sm:$0xff]
    %v89 = vlaneseq
    %v90 = vshrl.u32 %v89, 7
    %v91 = vadd.s32 %v90, 16
    %vm92 = vcmp.lt.s32.totalorder %v91, 17
    %v93 = vsel %vm92, %v88, %v8
    %v94 = vlaneseq
    %v95 = vand.u32 %v94, 127
    %vm97 = vcmp.lt.s32.totalorder %v95, 200
    %v98 = vsel %vm97, %v93, %v8
    %s99 = scalar_lea.vmem [#allocation16], 32
    %101 = vst [vmem:[%s99] sm:$0xff] %v98
    %s102 = scalar_lea.vmem [#allocation12], 40
    %v103 = vld [vmem:[%s102] sm:$0xff]
    %v104 = vlaneseq
    %v105 = vshrl.u32 %v104, 7
    %v106 = vadd.s32 %v105, 16
    %vm107 = vcmp.lt.s32.totalorder %v106, 17
    %v108 = vsel %vm107, %v103, %v8
    %v109 = vlaneseq
    %v110 = vand.u32 %v109, 127
    %v111 = vadd.s32 %v110, 128
    %vm112 = vcmp.lt.s32.totalorder %v111, 200
    %v113 = vsel %vm112, %v108, %v8
    %s114 = scalar_lea.vmem [#allocation16], 40
    %116 = vst [vmem:[%s114] sm:$0xff] %v113
    %v117 = vld [vmem:[%s2] sm:$0x1]
    %v118 = vlaneseq
    %v119 = vshrl.u32 %v118, 7
    %vm121 = vcmp.lt.s32.totalorder %v119, 1
    %v122 = vsel %vm121, %v117, %v9
    %v123 = vlaneseq
    %v124 = vand.u32 %v123, 127
    %vm126 = vcmp.lt.s32.totalorder %v124, 200
    %v127 = vsel %vm126, %v122, %v9
    %129 = vst [vmem:[#allocation17] sm:$0x1] %v127
    %s130 = scalar_lea.vmem %s2, 1
    %v131 = vld [vmem:[%s130] sm:$0x1]
    %v132 = vlaneseq
    %v133 = vshrl.u32 %v132, 7
    %vm135 = vcmp.lt.s32.totalorder %v133, 1
    %v136 = vsel %vm135, %v131, %v9
    %v137 = vlaneseq
    %v138 = vand.u32 %v137, 127
    %v139 = vadd.s32 %v138, 128
    %vm140 = vcmp.lt.s32.totalorder %v139, 200
    %v141 = vsel %vm140, %v136, %v9
    %s142 = scalar_lea.vmem [#allocation17], 1
    %144 = vst [vmem:[%s142] sm:$0x1] %v141
    %v145 = vld [vmem:[#allocation16] sm:$0xff]
    %v146 = vld [vmem:[#allocation16 + $0x8] sm:$0xff]
    %v147 = vld [vmem:[#allocation16 + $0x10] sm:$0xff]
    %v148 = vld [vmem:[#allocation16 + $0x18] sm:$0xff]
    %v149 = vld [vmem:[#allocation16 + $0x20] sm:$0x1]
    %v150 = vld [vmem:[#allocation16 + $0x28] sm:$0x1]
    %v151 = vld [vmem:[#allocation17] sm:$0x3]
    %vm152 = vcmask 1040384
    %v153 = vsel %vm152, %v149, -inf
    %v154 = vmax.f32 %v145, %v153
    %v155 = vmax.f32 %v154, %v147
    %v156 = vrot.slane %v155, 4
    %v157 = vmax.f32 %v155, %v156
    %v158 = vrot.slane %v157, 2
    %v159 = vmax.f32 %v157, %v158
    %v160 = vrot.slane %v159, 1
    %v161 = vmax.f32 %v159, %v160
    %v162 = vsel %vm152, %v150, -inf
    %v163 = vmax.f32 %v146, %v162
    %v164 = vmax.f32 %v163, %v148
    %v165 = vrot.slane %v164, 4
    %v166 = vmax.f32 %v164, %v165
    %v167 = vrot.slane %v166, 2
    %v168 = vmax.f32 %v166, %v167
    %v169 = vrot.slane %v168, 1
    %v170 = vmax.f32 %v168, %v169
    %v171 = vsub.f32 %v145, %v161
    %v172 = vsub.f32 %v146, %v170
    %v173 = vsub.f32 %v147, %v161
    %v174 = vsub.f32 %v148, %v170
    %v175 = vsub.f32 %v149, %v161
    %v176 = vsub.f32 %v150, %v170
    %v177 = vmul.f32 %v171, 1.442695
    %v178 = vpow.pop %v177
    %v179 = vmul.f32 %v172, 1.442695
    %v180 = vpow.pop %v179
    %v181 = vmul.f32 %v173, 1.442695
    %v182 = vpow.pop %v181
    %v183 = vmul.f32 %v174, 1.442695
    %v184 = vpow.pop %v183
    %v185 = vmul.f32 %v175, 1.442695
    %v186 = vpow.pop %v185
    %v187 = vmul.f32 %v176, 1.442695
    %v188 = vpow.pop %v187
    %v189 = vadd.f32 %v178, %v182
    %v190 = vsel %vm152, %v186, 0.0
    %v191 = vadd.f32 %v189, %v190
    %v192 = vrot.slane %v191, 4
    %v193 = vadd.f32 %v191, %v192
    %v194 = vrot.slane %v193, 2
    %v195 = vadd.f32 %v193, %v194
    %v196 = vrot.slane %v195, 1
    %v197 = vadd.f32 %v195, %v196
    %v198 = vadd.f32 %v180, %v184
    %v199 = vsel %vm152, %v188, 0.0
    %v200 = vadd.f32 %v198, %v199
    %v201 = vrot.slane %v200, 4
    %v202 = vadd.f32 %v200, %v201
    %v203 = vrot.slane %v202, 2
    %v204 = vadd.f32 %v202, %v203
    %v205 = vrot.slane %v204, 1
    %v206 = vadd.f32 %v204, %v205
    %v207 = vlog2.pop %v197
    %v208 = vmul.f32 %v207, 0.6931472
    %v209 = vlog2.pop %v206
    %v210 = vmul.f32 %v209, 0.6931472
    %v211 = vlaneseq
    %v212 = vshrl.u32 %v211, 7
    %v213 = vadd.s32 %v212, 8
    %v214 = vadd.s32 %v212, 16
    %v215 = vcvt.s32.f32 %v212
    %v216 = vcvt.s32.f32 %v213
    %v217 = vcvt.s32.f32 %v214
    %v219 = vlaneseq
    %v220 = vshrl.u32 %v219, 7
    %v221 = vsub.s32 0, %v220
    %v222 = vrot.slane %v151, %v221
    %v223 = vlaneseq
    %v224 = vshrl.u32 %v223, 7
    %v225 = vsub.s32 1, %v224
    %v226 = vrot.slane %v151, %v225
    %v229 = vsub.f32 %v215, %v222
    %v230 = vsub.f32 %v215, %v226
    %v231 = vsub.f32 %v216, %v222
    %v232 = vsub.f32 %v216, %v226
    %v233 = vsub.f32 %v217, %v222
    %v234 = vsub.f32 %v217, %v226
    %v235 = vand.u32 2147483647, %v229
    %v236 = vand.u32 2147483647, %v230
    %v237 = vand.u32 2147483647, %v231
    %v238 = vand.u32 2147483647, %v232
    %v239 = vand.u32 2147483647, %v233
    %v240 = vand.u32 2147483647, %v234
    %v241 = vsub.f32 1.0, %v235
    %v242 = vsub.f32 1.0, %v236
    %v243 = vsub.f32 1.0, %v237
    %v244 = vsub.f32 1.0, %v238
    %v245 = vsub.f32 1.0, %v239
    %v246 = vsub.f32 1.0, %v240
    %v247 = vmax.f32 %v241, 0.0
    %v248 = vmax.f32 %v242, 0.0
    %v249 = vmax.f32 %v243, 0.0
    %v250 = vmax.f32 %v244, 0.0
    %v251 = vmax.f32 %v245, 0.0
    %v252 = vmax.f32 %v246, 0.0
    %v253 = vmul.f32 %v247, %v171
    %v254 = vmul.f32 %v248, %v172
    %v255 = vmul.f32 %v249, %v173
    %v256 = vmul.f32 %v250, %v174
    %v257 = vmul.f32 %v251, %v175
    %v258 = vmul.f32 %v252, %v176
    %v259 = vadd.f32 %v253, %v255
    %v260 = vsel %vm152, %v257, 0.0
    %v261 = vadd.f32 %v259, %v260
    %v262 = vrot.slane %v261, 4
    %v263 = vadd.f32 %v261, %v262
    %v264 = vrot.slane %v263, 2
    %v265 = vadd.f32 %v263, %v264
    %v266 = vrot.slane %v265, 1
    %v267 = vadd.f32 %v265, %v266
    %v268 = vadd.f32 %v254, %v256
    %v269 = vsel %vm152, %v258, 0.0
    %v270 = vadd.f32 %v268, %v269
    %v271 = vrot.slane %v270, 4
    %v272 = vadd.f32 %v270, %v271
    %v273 = vrot.slane %v272, 2
    %v274 = vadd.f32 %v272, %v273
    %v275 = vrot.slane %v274, 1
    %v276 = vadd.f32 %v274, %v275
    %v277 = vsub.f32 %v208, %v267
    %v278 = vsub.f32 %v210, %v276
    %v281 = vcombine.low %v277, %v278
    %v283 = vunpack.c.l.s4 1966171168
    %v284 = vunpack.c.0.s8 %v283
    %v285 = vlaneseq
    %v286 = vshrl.u32 %v285, 7
    %v287 = vsub.s32 %v284, %v286
    %v288 = vrot.slane %v281, %v287
    %v290 = vunpack.c.l.s4 1966171168
    %v291 = vunpack.c.0.s8 %v290
    %v292 = vlaneseq
    %v293 = vshrl.u32 %v292, 7
    %v294 = vsub.s32 %v291, %v293
    %v295 = vrot.slane %v288, %v294
    %v297 = vlaneseq
    %vm298 = vcmp.ge.s32.totalorder %v297, 0
    %vm299 = vcmp.lt.s32.totalorder %v297, 256
    %vm300 = vmand %vm298, %vm299
    %301 = vst.msk [vmem:[#allocation15] sm:$0x3] %vm300, %v295
    // Predicated region
    $region14: #{distribution_focal_loss_pallas.2} parent=1 // pred_check
      _
    $region15: #{distribution_focal_loss_pallas.2} parent=1 // pred_check_branch
      %303 = sbr.rel (0) target = $region17
    $region16: #{distribution_focal_loss_pallas.2} parent=1 // pred_region
      %s305 = ssub.s32 32, 32
      %306 = vsyncadd [#allocation14], %s305
      %s308 = sshll.u32 [#allocation15], 4
      %s309 = int_to_ptr.vmem [resolvable:$true] %s308
      %311 = dma.vmem_to_hbm [thread:$0]  %s309, 32, %s3, [#allocation14]
    $region17: #{distribution_focal_loss_pallas.2} parent=1 // pred_fallthru
      _
    // Predicated region
    $region18: #{distribution_focal_loss_pallas.2} parent=1 // pred_check
      _
    $region19: #{distribution_focal_loss_pallas.2} parent=1 // pred_check_branch
      %313 = sbr.rel (0) target = $region21
    $region20: #{distribution_focal_loss_pallas.2} parent=1 // pred_region
      %314 = dma.done [#allocation14], 32
    $region21: #{distribution_focal_loss_pallas.2} parent=1 // pred_fallthru
      _
    %315 = vsyncpa [#allocation13], 1
    %316 = vsyncpa [#allocation14], 1

</llo_original>
